<compile_context>
chip_gen: v6e
topology: v6e:2x2x1
jax: 0.10.0
libtpu: 0.0.40
codegen_flags: <defaults>
</compile_context>

<pallas_src>
from functools import partial

import numpy as np
import jax
import jax.numpy as jnp
from jax.experimental import pallas as pl
from jax.experimental.pallas import tpu as pltpu


# ----------------------------------------------------------------------------
# Pallas kernel: fused softmax + (optional) one-hot + masked spatial reduction
# ----------------------------------------------------------------------------
def _dice_partial_kernel(x_ref, t_ref, i_ref, po_ref, pt_ref, *,
                         S, ts, bpc, onehot_target, need_mask):
    """One (batch n, chunk c, spatial block b) grid step.

    x_ref : (1, C, TS)        logits block (native dtype, cast to f32 here)
    t_ref : (1, 1, TS) int    labels block         (onehot_target=True)
            (1, C, TS) float  dense target block   (onehot_target=False)
    i_ref, po_ref, pt_ref : (1, 1, C, 1) f32 running sums of p*t, p, t over
                            the spatial blocks of this (n, chunk) group.
    """
    b = pl.program_id(2)

    @pl.when(b == 0)
    def _():
        i_ref[...] = jnp.zeros_like(i_ref)
        po_ref[...] = jnp.zeros_like(po_ref)
        pt_ref[...] = jnp.zeros_like(pt_ref)

    x = x_ref[0].astype(jnp.float32)                  # (C, TS)
    C = x.shape[0]

    # Numerically stable softmax over channels (sublane axis).
    m = jnp.max(x, axis=0, keepdims=True)             # (1, TS)
    e = jnp.exp(x - m)                                 # (C, TS)
    z = jnp.sum(e, axis=0, keepdims=True)              # (1, TS)
    p = e * pl.reciprocal(z, approx=False)             # exact; (C, TS)

    if onehot_target:
        labels = t_ref[0].astype(jnp.int32)            # (1, TS)
        cls = jax.lax.broadcasted_iota(jnp.int32, (C, ts), 0)
        tgt = (cls == labels).astype(jnp.float32)      # in-kernel one-hot
    else:
        tgt = t_ref[0].astype(jnp.float32)             # (C, TS)

    if need_mask:
        # Tail-block validity.  Select (not multiply) so garbage out-of-bounds
        # data (NaN/Inf logits, bogus labels) cannot propagate (NaN*0 = NaN).
        # NOTE: int32 position math limits S to < 2**31 spatial elements.
        blk = pl.program_id(1) * bpc + b
        pos = jax.lax.broadcasted_iota(jnp.int32, (1, ts), 1) + blk * ts
        valid = pos < S                                # (1, TS)
        p = jnp.where(valid, p, 0.0)
        tgt = jnp.where(valid, tgt, 0.0)

    i_ref[...] += jnp.sum(p * tgt, axis=-1, keepdims=True)[None, None]
    po_ref[...] += jnp.sum(p, axis=-1, keepdims=True)[None, None]
    pt_ref[...] += jnp.sum(tgt, axis=-1, keepdims=True)[None, None]


# ----------------------------------------------------------------------------
# Wrapper: tiling decisions + pallas_call + tiny dice epilogue
# ----------------------------------------------------------------------------
_VMEM_WORKING_BUDGET = 28 * 1024 * 1024   # per-step working-set target (bytes)
_VMEM_LIMIT_BYTES = 48 * 1024 * 1024      # explicit scoped-VMEM limit (v5e..v7x safe)


def _pick_tile(S, C, x_bytes, t_chan, t_bytes, max_tile_s):
    """Largest lane-dense (multiple of 128) spatial tile that fits the budget."""
    if S <= 128:
        return S                                   # block == full array dim
    # Per spatial element: double-buffered pipeline inputs + ~6 f32 (C,)
    # intermediates (x, e, p, tgt, products) materialized by the kernel body.
    per_spatial = 2 * (C * x_bytes + t_chan * t_bytes) + 6 * C * 4
    ts = _VMEM_WORKING_BUDGET // per_spatial
    if max_tile_s is not None:
        ts = min(ts, int(max_tile_s))
    ts = min(ts, S)
    return max(128, (ts // 128) * 128)


def dice_loss(output, target, *, max_tile_s=None):
    """DC.forward(output, target): 1 - mean dice, with softmax over dim 1."""
    N, C = int(output.shape[0]), int(output.shape[1])
    spatial = output.shape[2:]
    S = int(np.prod(spatial)) if len(spatial) > 0 else 1

    # Metadata-only reshapes; inputs stream in their native dtypes.
    x = output.reshape(N, C, S)
    onehot_target = tuple(target.shape) != tuple(output.shape)
    if onehot_target:
        t = target.reshape(N, 1, S)
        if not jnp.issubdtype(t.dtype, jnp.integer):
            t = t.astype(jnp.int32)                # only if labels came as float
        t_chan = 1
    else:
        t = target.reshape(N, C, S)
        t_chan = C

    x_bytes = jnp.dtype(x.dtype).itemsize
    t_bytes = jnp.dtype(t.dtype).itemsize

    TS = _pick_tile(S, C, x_bytes, t_chan, t_bytes, max_tile_s)
    nblocks = pl.cdiv(S, TS)
    need_mask = (S % TS) != 0

    # Megacore occupancy: if the batch alone cannot feed 2 TensorCores, split
    # the spatial-block axis into a leading parallel chunk axis (clean split
    # only) and combine the per-chunk partials in the epilogue.
    n_chunks = 1
    if N < 2 and nblocks >= 2 and nblocks % 2 == 0:
        n_chunks = 2
    bpc = nblocks // n_chunks

    grid = (N, n_chunks, bpc)
    kernel = partial(_dice_partial_kernel, S=S, ts=TS, bpc=bpc,
                     onehot_target=onehot_target, need_mask=need_mask)

    out_shapes = [jax.ShapeDtypeStruct((N, n_chunks, C, 1), jnp.float32)] * 3
    out_spec = pl.BlockSpec((1, 1, C, 1), lambda n, c, b: (n, c, 0, 0))

    cost = pl.CostEstimate(
        flops=6 * N * C * S,
        transcendentals=N * C * S,
        bytes_accessed=N * S * (C * x_bytes + t_chan * t_bytes)
        + 3 * N * n_chunks * C * 4,
    )

    intersect, p_sum, t_sum = pl.pallas_call(
        kernel,
        out_shape=out_shapes,
        grid=grid,
        in_specs=[
            pl.BlockSpec((1, C, TS), lambda n, c, b: (n, 0, c * bpc + b)),
            pl.BlockSpec((1, t_chan, TS), lambda n, c, b: (n, 0, c * bpc + b)),
        ],
        out_specs=[out_spec, out_spec, out_spec],
        compiler_params=pltpu.CompilerParams(
            dimension_semantics=("parallel", "parallel", "arbitrary"),
            vmem_limit_bytes=_VMEM_LIMIT_BYTES),
        cost_estimate=cost,
    )(x, t)

    # Tiny epilogue in plain JAX: combine chunk partials, dice, mean.
    intersect = jnp.sum(intersect[..., 0], axis=1)   # (N, C)
    p_sum = jnp.sum(p_sum[..., 0], axis=1)
    t_sum = jnp.sum(t_sum[..., 0], axis=1)
    dice = 2.0 * intersect / (p_sum + t_sum + 1e-19)
    return 1.0 - jnp.mean(dice)


# ----------------------------------------------------------------------------
# Pure-JAX reference (correctness check only)
# ----------------------------------------------------------------------------
def dice_loss_ref(output, target):
    p = jax.nn.softmax(output, axis=1)
    if tuple(target.shape) != tuple(output.shape):
        labels = target.reshape(output.shape[0], *output.shape[2:])
        oh = jax.nn.one_hot(labels.astype(jnp.int32), output.shape[1],
                            axis=1, dtype=p.dtype)
    else:
        oh = target.astype(p.dtype)
    axes = tuple(range(2, output.ndim))
    intersect = jnp.sum(p * oh, axis=axes)
    dice = 2.0 * intersect / (jnp.sum(p, axis=axes) + jnp.sum(oh, axis=axes) + 1e-19)
    return 1.0 - jnp.mean(dice)


if __name__ == "__main__":
    key = jax.random.PRNGKey(0)
    k1, k2, k3, k4 = jax.random.split(key, 4)

    # --- Case 1: integer labels (in-kernel one-hot), auto tile (single block).
    N, C, H, W = 2, 4, 16, 16
    logits = jax.random.normal(k1, (N, C, H, W), jnp.float32)
    labels = jax.random.randint(k2, (N, 1, H, W), 0, C, dtype=jnp.int32)
    loss = jax.block_until_ready(jax.jit(dice_loss)(logits, labels))
    ref = dice_loss_ref(logits, labels)
    assert loss.shape == () and bool(jnp.isfinite(loss))
    assert abs(float(loss) - float(ref)) < 1e-5, (float(loss), float(ref))

    # --- Case 2: dense (same-shape) target, multi spatial blocks (no mask).
    dense = jax.nn.one_hot(labels[:, 0], C, axis=1, dtype=jnp.float32)
    loss2 = jax.block_until_ready(
        jax.jit(partial(dice_loss, max_tile_s=128))(logits, dense))
    ref2 = dice_loss_ref(logits, dense)
    assert bool(jnp.isfinite(loss2))
    assert abs(float(loss2) - float(ref2)) < 1e-5, (float(loss2), float(ref2))

    # --- Case 3: N=1 (exercises megacore chunk split) with a non-128-multiple
    #     spatial size (exercises the tail-block where-mask path).
    N3, H3, W3 = 1, 20, 20
    logits3 = jax.random.normal(k3, (N3, C, H3, W3), jnp.float32)
    labels3 = jax.random.randint(k4, (N3, 1, H3, W3), 0, C, dtype=jnp.int32)
    loss3 = jax.block_until_ready(
        jax.jit(partial(dice_loss, max_tile_s=128))(logits3, labels3))
    ref3 = dice_loss_ref(logits3, labels3)
    assert bool(jnp.isfinite(loss3))
    assert abs(float(loss3) - float(ref3)) < 1e-5, (float(loss3), float(ref3))

    print("KERNEL_OK")
</pallas_src>

<mosaic_0001>
module attributes {stable_mosaic.version = 11 : i64} {
  func.func @_dice_partial_kernel(%arg0: i32, %arg1: i32, %arg2: i32, %arg3: memref<1x4x256xf32, #tpu.memory_space<vmem>>, %arg4: memref<1x1x256xi32, #tpu.memory_space<vmem>>, %arg5: memref<1x1x4x1xf32, #tpu.memory_space<vmem>>, %arg6: memref<1x1x4x1xf32, #tpu.memory_space<vmem>>, %arg7: memref<1x1x4x1xf32, #tpu.memory_space<vmem>>) attributes {dimension_semantics = [#tpu.dimension_semantics<parallel>, #tpu.dimension_semantics<parallel>, #tpu.dimension_semantics<arbitrary>], iteration_bounds = array<i64: 2, 1, 1>, scalar_prefetch = 0 : i64, scratch_operands = 0 : i64, tpu.core_type = #tpu.core_type<tc>, window_params = [{transform_indices = @transform_0, window_bounds = array<i64: 1, 4, 256>}, {transform_indices = @transform_1, window_bounds = array<i64: 1, 1, 256>}, {transform_indices = @transform_2, window_bounds = array<i64: 1, 1, 4, 1>}, {transform_indices = @transform_3, window_bounds = array<i64: 1, 1, 4, 1>}, {transform_indices = @transform_4, window_bounds = array<i64: 1, 1, 4, 1>}]} {
    %c0_i32 = arith.constant 0 : i32
    %0 = arith.cmpi eq, %arg2, %c0_i32 : i32
    %1 = arith.extui %0 : i1 to i32
    %c0_i32_0 = arith.constant 0 : i32
    %2 = arith.cmpi ne, %1, %c0_i32_0 : i32
    scf.if %2 {
      %cst_34 = arith.constant 0.000000e+00 : f32
      %41 = vector.broadcast %cst_34 : f32 to vector<1x1x4x1xf32>
      %c0_35 = arith.constant 0 : index
      %c0_36 = arith.constant 0 : index
      %c0_37 = arith.constant 0 : index
      %c0_38 = arith.constant 0 : index
      %42 = vector.load %arg5[%c0_35, %c0_36, %c0_37, %c0_38] : memref<1x1x4x1xf32, #tpu.memory_space<vmem>>, vector<1x1x4x1xf32>
      tpu.vector_store %arg5[%c0_35, %c0_36, %c0_37, %c0_38], %41 {strides = array<i32>} : memref<1x1x4x1xf32, #tpu.memory_space<vmem>>, vector<1x1x4x1xf32>,
      %cst_39 = arith.constant 0.000000e+00 : f32
      %43 = vector.broadcast %cst_39 : f32 to vector<1x1x4x1xf32>
      %c0_40 = arith.constant 0 : index
      %c0_41 = arith.constant 0 : index
      %c0_42 = arith.constant 0 : index
      %c0_43 = arith.constant 0 : index
      %44 = vector.load %arg6[%c0_40, %c0_41, %c0_42, %c0_43] : memref<1x1x4x1xf32, #tpu.memory_space<vmem>>, vector<1x1x4x1xf32>
      tpu.vector_store %arg6[%c0_40, %c0_41, %c0_42, %c0_43], %43 {strides = array<i32>} : memref<1x1x4x1xf32, #tpu.memory_space<vmem>>, vector<1x1x4x1xf32>,
      %cst_44 = arith.constant 0.000000e+00 : f32
      %45 = vector.broadcast %cst_44 : f32 to vector<1x1x4x1xf32>
      %c0_45 = arith.constant 0 : index
      %c0_46 = arith.constant 0 : index
      %c0_47 = arith.constant 0 : index
      %c0_48 = arith.constant 0 : index
      %46 = vector.load %arg7[%c0_45, %c0_46, %c0_47, %c0_48] : memref<1x1x4x1xf32, #tpu.memory_space<vmem>>, vector<1x1x4x1xf32>
      tpu.vector_store %arg7[%c0_45, %c0_46, %c0_47, %c0_48], %45 {strides = array<i32>} : memref<1x1x4x1xf32, #tpu.memory_space<vmem>>, vector<1x1x4x1xf32>,
    } else {
    }
    %c0 = arith.constant 0 : index
    %c0_1 = arith.constant 0 : index
    %c0_2 = arith.constant 0 : index
    %3 = vector.load %arg3[%c0, %c0_1, %c0_2] : memref<1x4x256xf32, #tpu.memory_space<vmem>>, vector<1x4x256xf32>
    %4 = vector.shape_cast %3 : vector<1x4x256xf32> to vector<4x256xf32>
    %cst = arith.constant dense<0xFF800000> : vector<256xf32>
    %5 = vector.multi_reduction <maximumf>, %4, %cst [0] : vector<4x256xf32> to vector<256xf32>
    %6 = vector.shape_cast %5 : vector<256xf32> to vector<1x256xf32>
    %7 = vector.broadcast %6 : vector<1x256xf32> to vector<4x256xf32>
    %8 = arith.subf %4, %7 : vector<4x256xf32>
    %9 = math.exp %8 : vector<4x256xf32>
    %cst_3 = arith.constant dense<0.000000e+00> : vector<256xf32>
    %10 = vector.multi_reduction <add>, %9, %cst_3 [0] : vector<4x256xf32> to vector<256xf32>
    %11 = vector.shape_cast %10 : vector<256xf32> to vector<1x256xf32>
    %12 = tpu.reciprocal %11 : vector<1x256xf32> -> vector<1x256xf32>
    %13 = vector.broadcast %12 : vector<1x256xf32> to vector<4x256xf32>
    %14 = arith.mulf %9, %13 : vector<4x256xf32>
    %c0_4 = arith.constant 0 : index
    %c0_5 = arith.constant 0 : index
    %c0_6 = arith.constant 0 : index
    %15 = vector.load %arg4[%c0_4, %c0_5, %c0_6] : memref<1x1x256xi32, #tpu.memory_space<vmem>>, vector<1x1x256xi32>
    %16 = vector.shape_cast %15 : vector<1x1x256xi32> to vector<1x256xi32>
    %17 = tpu.iota {dimensions = array<i32: 0>} : vector<4x256xi32>
    %18 = vector.broadcast %16 : vector<1x256xi32> to vector<4x256xi32>
    %19 = arith.cmpi eq, %17, %18 : vector<4x256xi32>
    %20 = arith.extui %19 : vector<4x256xi1> to vector<4x256xi32>
    %21 = arith.sitofp %20 : vector<4x256xi32> to vector<4x256xf32>
    %c0_7 = arith.constant 0 : index
    %c0_8 = arith.constant 0 : index
    %c0_9 = arith.constant 0 : index
    %c0_10 = arith.constant 0 : index
    %22 = vector.load %arg5[%c0_7, %c0_8, %c0_9, %c0_10] : memref<1x1x4x1xf32, #tpu.memory_space<vmem>>, vector<1x1x4x1xf32>
    %23 = arith.mulf %14, %21 : vector<4x256xf32>
    %cst_11 = arith.constant dense<0.000000e+00> : vector<4xf32>
    %24 = vector.multi_reduction <add>, %23, %cst_11 [1] : vector<4x256xf32> to vector<4xf32>
    %25 = vector.shape_cast %24 : vector<4xf32> to vector<4x1xf32>
    %26 = vector.shape_cast %25 : vector<4x1xf32> to vector<1x1x4x1xf32>
    %27 = arith.addf %22, %26 : vector<1x1x4x1xf32>
    %c0_12 = arith.constant 0 : index
    %c0_13 = arith.constant 0 : index
    %c0_14 = arith.constant 0 : index
    %c0_15 = arith.constant 0 : index
    %28 = vector.load %arg5[%c0_12, %c0_13, %c0_14, %c0_15] : memref<1x1x4x1xf32, #tpu.memory_space<vmem>>, vector<1x1x4x1xf32>
    tpu.vector_store %arg5[%c0_12, %c0_13, %c0_14, %c0_15], %27 {strides = array<i32>} : memref<1x1x4x1xf32, #tpu.memory_space<vmem>>, vector<1x1x4x1xf32>,
    %c0_16 = arith.constant 0 : index
    %c0_17 = arith.constant 0 : index
    %c0_18 = arith.constant 0 : index
    %c0_19 = arith.constant 0 : index
    %29 = vector.load %arg6[%c0_16, %c0_17, %c0_18, %c0_19] : memref<1x1x4x1xf32, #tpu.memory_space<vmem>>, vector<1x1x4x1xf32>
    %cst_20 = arith.constant dense<0.000000e+00> : vector<4xf32>
    %30 = vector.multi_reduction <add>, %14, %cst_20 [1] : vector<4x256xf32> to vector<4xf32>
    %31 = vector.shape_cast %30 : vector<4xf32> to vector<4x1xf32>
    %32 = vector.shape_cast %31 : vector<4x1xf32> to vector<1x1x4x1xf32>
    %33 = arith.addf %29, %32 : vector<1x1x4x1xf32>
    %c0_21 = arith.constant 0 : index
    %c0_22 = arith.constant 0 : index
    %c0_23 = arith.constant 0 : index
    %c0_24 = arith.constant 0 : index
    %34 = vector.load %arg6[%c0_21, %c0_22, %c0_23, %c0_24] : memref<1x1x4x1xf32, #tpu.memory_space<vmem>>, vector<1x1x4x1xf32>
    tpu.vector_store %arg6[%c0_21, %c0_22, %c0_23, %c0_24], %33 {strides = array<i32>} : memref<1x1x4x1xf32, #tpu.memory_space<vmem>>, vector<1x1x4x1xf32>,
    %c0_25 = arith.constant 0 : index
    %c0_26 = arith.constant 0 : index
    %c0_27 = arith.constant 0 : index
    %c0_28 = arith.constant 0 : index
    %35 = vector.load %arg7[%c0_25, %c0_26, %c0_27, %c0_28] : memref<1x1x4x1xf32, #tpu.memory_space<vmem>>, vector<1x1x4x1xf32>
    %cst_29 = arith.constant dense<0.000000e+00> : vector<4xf32>
    %36 = vector.multi_reduction <add>, %21, %cst_29 [1] : vector<4x256xf32> to vector<4xf32>
    %37 = vector.shape_cast %36 : vector<4xf32> to vector<4x1xf32>
    %38 = vector.shape_cast %37 : vector<4x1xf32> to vector<1x1x4x1xf32>
    %39 = arith.addf %35, %38 : vector<1x1x4x1xf32>
    %c0_30 = arith.constant 0 : index
    %c0_31 = arith.constant 0 : index
    %c0_32 = arith.constant 0 : index
    %c0_33 = arith.constant 0 : index
    %40 = vector.load %arg7[%c0_30, %c0_31, %c0_32, %c0_33] : memref<1x1x4x1xf32, #tpu.memory_space<vmem>>, vector<1x1x4x1xf32>
    tpu.vector_store %arg7[%c0_30, %c0_31, %c0_32, %c0_33], %39 {strides = array<i32>} : memref<1x1x4x1xf32, #tpu.memory_space<vmem>>, vector<1x1x4x1xf32>,
    return
  }
  func.func @transform_0(%arg0: i32, %arg1: i32, %arg2: i32) -> (i32, i32, i32) {
    %c1_i32 = arith.constant 1 : i32
    %0 = arith.muli %arg1, %c1_i32 : i32
    %1 = arith.addi %0, %arg2 : i32
    %c0_i32 = arith.constant 0 : i32
    %c0_i32_0 = arith.constant 0 : i32
    return %arg0, %c0_i32, %1 : i32, i32, i32
  }
  func.func @transform_1(%arg0: i32, %arg1: i32, %arg2: i32) -> (i32, i32, i32) {
    %c1_i32 = arith.constant 1 : i32
    %0 = arith.muli %arg1, %c1_i32 : i32
    %1 = arith.addi %0, %arg2 : i32
    %c0_i32 = arith.constant 0 : i32
    %c0_i32_0 = arith.constant 0 : i32
    return %arg0, %c0_i32, %1 : i32, i32, i32
  }
  func.func @transform_2(%arg0: i32, %arg1: i32, %arg2: i32) -> (i32, i32, i32, i32) {
    %c0_i32 = arith.constant 0 : i32
    %c0_i32_0 = arith.constant 0 : i32
    %c0_i32_1 = arith.constant 0 : i32
    return %arg0, %arg1, %c0_i32, %c0_i32_0 : i32, i32, i32, i32
  }
  func.func @transform_3(%arg0: i32, %arg1: i32, %arg2: i32) -> (i32, i32, i32, i32) {
    %c0_i32 = arith.constant 0 : i32
    %c0_i32_0 = arith.constant 0 : i32
    %c0_i32_1 = arith.constant 0 : i32
    return %arg0, %arg1, %c0_i32, %c0_i32_0 : i32, i32, i32, i32
  }
  func.func @transform_4(%arg0: i32, %arg1: i32, %arg2: i32) -> (i32, i32, i32, i32) {
    %c0_i32 = arith.constant 0 : i32
    %c0_i32_0 = arith.constant 0 : i32
    %c0_i32_1 = arith.constant 0 : i32
    return %arg0, %arg1, %c0_i32, %c0_i32_0 : i32, i32, i32, i32
  }
}

</mosaic_0001>

<llo_original>
// kernel: dice_loss.1
$region0: #{dice_loss.1}
  #allocation0 [shape = 'u32[]', space=smem, size = 0x4, offset = 0x4, fixed_abs, tag = 'smem constant byte address 0x4 - core index']
  #allocation1 [shape = 'u32[144,128]{1,0:T(1,128)}', space=vmem, size = 0x12000, scoped, tag = 'internal scratch']
  %s0 = inlined_call_operand.vmem [shape: f32[2,4,256], index: 0, kind: input, shape index: {}]
  %s1 = inlined_call_operand.vmem [shape: s32[2,1,256], index: 1, kind: input, shape index: {}]
  %s2 = inlined_call_operand.vmem [shape: f32[2,1,4,1], index: 2, kind: output, shape index: {0}]
  %s3 = inlined_call_operand.vmem [shape: f32[2,1,4,1], index: 3, kind: output, shape index: {1}]
  %s4 = inlined_call_operand.vmem [shape: f32[2,1,4,1], index: 4, kind: output, shape index: {2}]
  %5 = xla_tuple %s2, %s3, %s4
  %s6 = sld [smem:[#allocation0]]
  $region61: #{dice_loss.1} parent=0
    _
  %s8 = ssub.s32 1, %s6
  %s9 = scalar_select 0, %s8, %s6
  loop: start=0, step=1, limit=4
  $region2: #{dice_loss.1} parent=0 // loop_pre_header
    _
  $region3: #{dice_loss.1} parent=0 // loop_header
    %s11 = sphi 0, %s15
    %p12 = scmp.ge.s32.totalorder %s11, 4
    %s18 = sphi 0, %s37
    %s19 = sphi 0, %s33
    %s20 = sphi 0, %s29
    %s21 = sphi 0, %s18
    %s22 = sphi 0, %s19
    %s23 = sphi 0, %s20
    %s24 = sphi 0, %s21
    %s25 = sphi 0, %s22
    %s26 = sphi 0, %s23
    %s44 = sphi 0, %s46
    %s47 = sphi 0, %s44
    %s48 = sphi 0, %s47
    %s64 = sphi 0, %s48
    %s74 = sphi 0, %s76
    %s77 = sphi 0, %s74
    %s78 = sphi 0, %s77
    %s94 = sphi 0, %s78
    %s102 = sphi 0, %s104
    %s105 = sphi 0, %s102
    %s106 = sphi 0, %s105
    %s122 = sphi 0, %s106
    %s130 = sphi 0, %s132
    %s133 = sphi 0, %s130
    %s134 = sphi 0, %s133
    %s150 = sphi 0, %s134
    %s158 = sphi 0, %s160
    %s161 = sphi 0, %s158
    %s162 = sphi 0, %s161
    %s178 = sphi 0, %s162
  $region4: #{dice_loss.1} parent=0 // loop_header_branch
    %14 = sbr.rel (%p12) target = $region8
  $region5: #{dice_loss.1} parent=0 // loop_body
    %s16 = ssub.s32 %s11, 1
    %s17 = ssub.s32 %s11, 2
    %s27 = sadd.s32 1, %s20
    %p28 = scmp.ge.s32.totalorder %s27, 1
    %s29 = scalar_select %p28, 0, %s27
    %s30 = sadd.s32 1, %s19
    %s31 = scalar_select %p28, %s30, %s19
    %p32 = scmp.ge.s32.totalorder %s31, 1
    %s33 = scalar_select %p32, 0, %s31
    %s34 = sadd.s32 1, %s18
    %s35 = scalar_select %p32, %s34, %s18
    %p36 = scmp.ge.s32.totalorder %s35, 2
    %s37 = scalar_select %p36, 0, %s35
    %s38 = sadd.s32 %s19, %s20
    %s39 = sadd.s32 %s33, %s29
    %s40 = ssub.s32 %s18, %s37
    %s41 = ssub.s32 %s38, %s39
    %s42 = sor.u32 %s40, %s41
    %p43 = scmp.eq.s32.totalorder %s42, 0
    %s45 = sadd.s32 %s44, 1
    %s46 = scalar_select %p43, %s44, %s45
    %p49 = pneg %p43
    %p50 = scmp.eq.s32.totalorder %s11, 1
    %p51 = por %p49, %p50
    %p52 = scmp.ne.s32.totalorder %s44, %s47
    %p53 = scmp.eq.s32.totalorder %s11, 0
    %p54 = por %p52, %p53
    %p55 = scmp.ne.s32.totalorder %s44, %s47
    %p56 = scmp.eq.s32.totalorder %s16, 1
    %p57 = por %p55, %p56
    %p58 = scmp.ne.s32.totalorder %s47, %s48
    %p59 = scmp.eq.s32.totalorder %s16, 0
    %p60 = por %p58, %p59
    %p61 = scmp.ne.s32.totalorder %s47, %s48
    %p62 = scmp.eq.s32.totalorder %s17, 1
    %p63 = por %p61, %p62
    %p65 = scmp.ne.s32.totalorder %s48, %s64
    %p66 = scmp.eq.s32.totalorder %s17, 0
    %p67 = por %p65, %p66
    %s68 = sadd.s32 %s19, %s20
    %s69 = sadd.s32 %s33, %s29
    %s70 = ssub.s32 %s18, %s37
    %s71 = ssub.s32 %s68, %s69
    %s72 = sor.u32 %s70, %s71
    %p73 = scmp.eq.s32.totalorder %s72, 0
    %s75 = sadd.s32 %s74, 1
    %s76 = scalar_select %p73, %s74, %s75
    %p79 = pneg %p73
    %p80 = scmp.eq.s32.totalorder %s11, 1
    %p81 = por %p79, %p80
    %p82 = scmp.ne.s32.totalorder %s74, %s77
    %p83 = scmp.eq.s32.totalorder %s11, 0
    %p84 = por %p82, %p83
    %p85 = scmp.ne.s32.totalorder %s74, %s77
    %p86 = scmp.eq.s32.totalorder %s16, 1
    %p87 = por %p85, %p86
    %p88 = scmp.ne.s32.totalorder %s77, %s78
    %p89 = scmp.eq.s32.totalorder %s16, 0
    %p90 = por %p88, %p89
    %p91 = scmp.ne.s32.totalorder %s77, %s78
    %p92 = scmp.eq.s32.totalorder %s17, 1
    %p93 = por %p91, %p92
    %p95 = scmp.ne.s32.totalorder %s78, %s94
    %p96 = scmp.eq.s32.totalorder %s17, 0
    %p97 = por %p95, %p96
    %s98 = ssub.s32 %s18, %s37
    %s99 = ssub.s32 %s19, %s33
    %s100 = sor.u32 %s98, %s99
    %p101 = scmp.eq.s32.totalorder %s100, 0
    %s103 = sadd.s32 %s102, 1
    %s104 = scalar_select %p101, %s102, %s103
    %p107 = pneg %p101
    %p108 = scmp.eq.s32.totalorder %s11, 1
    %p109 = por %p107, %p108
    %p110 = scmp.ne.s32.totalorder %s102, %s105
    %p111 = scmp.eq.s32.totalorder %s11, 0
    %p112 = por %p110, %p111
    %p113 = scmp.ne.s32.totalorder %s102, %s105
    %p114 = scmp.eq.s32.totalorder %s16, 1
    %p115 = por %p113, %p114
    %p116 = scmp.ne.s32.totalorder %s105, %s106
    %p117 = scmp.eq.s32.totalorder %s16, 0
    %p118 = por %p116, %p117
    %p119 = scmp.ne.s32.totalorder %s105, %s106
    %p120 = scmp.eq.s32.totalorder %s17, 1
    %p121 = por %p119, %p120
    %p123 = scmp.ne.s32.totalorder %s106, %s122
    %p124 = scmp.eq.s32.totalorder %s17, 0
    %p125 = por %p123, %p124
    %s126 = ssub.s32 %s18, %s37
    %s127 = ssub.s32 %s19, %s33
    %s128 = sor.u32 %s126, %s127
    %p129 = scmp.eq.s32.totalorder %s128, 0
    %s131 = sadd.s32 %s130, 1
    %s132 = scalar_select %p129, %s130, %s131
    %p135 = pneg %p129
    %p136 = scmp.eq.s32.totalorder %s11, 1
    %p137 = por %p135, %p136
    %p138 = scmp.ne.s32.totalorder %s130, %s133
    %p139 = scmp.eq.s32.totalorder %s11, 0
    %p140 = por %p138, %p139
    %p141 = scmp.ne.s32.totalorder %s130, %s133
    %p142 = scmp.eq.s32.totalorder %s16, 1
    %p143 = por %p141, %p142
    %p144 = scmp.ne.s32.totalorder %s133, %s134
    %p145 = scmp.eq.s32.totalorder %s16, 0
    %p146 = por %p144, %p145
    %p147 = scmp.ne.s32.totalorder %s133, %s134
    %p148 = scmp.eq.s32.totalorder %s17, 1
    %p149 = por %p147, %p148
    %p151 = scmp.ne.s32.totalorder %s134, %s150
    %p152 = scmp.eq.s32.totalorder %s17, 0
    %p153 = por %p151, %p152
    %s154 = ssub.s32 %s18, %s37
    %s155 = ssub.s32 %s19, %s33
    %s156 = sor.u32 %s154, %s155
    %p157 = scmp.eq.s32.totalorder %s156, 0
    %s159 = sadd.s32 %s158, 1
    %s160 = scalar_select %p157, %s158, %s159
    %p163 = pneg %p157
    %p164 = scmp.eq.s32.totalorder %s11, 1
    %p165 = por %p163, %p164
    %p166 = scmp.ne.s32.totalorder %s158, %s161
    %p167 = scmp.eq.s32.totalorder %s11, 0
    %p168 = por %p166, %p167
    %p169 = scmp.ne.s32.totalorder %s158, %s161
    %p170 = scmp.eq.s32.totalorder %s16, 1
    %p171 = por %p169, %p170
    %p172 = scmp.ne.s32.totalorder %s161, %s162
    %p173 = scmp.eq.s32.totalorder %s16, 0
    %p174 = por %p172, %p173
    %p175 = scmp.ne.s32.totalorder %s161, %s162
    %p176 = scmp.eq.s32.totalorder %s17, 1
    %p177 = por %p175, %p176
    %p179 = scmp.ne.s32.totalorder %s162, %s178
    %p180 = scmp.eq.s32.totalorder %s17, 0
    %p181 = por %p179, %p180
    %p182 = scmp.le.s32.totalorder 1, %s11
    %p183 = scmp.lt.s32.totalorder %s11, 3
    %p184 = pnand %p182, %p183
    %p185 = pneg %p184
    // Predicated region
    $region9: #{dice_loss.1} parent=5 // pred_check
      _
    $region10: #{dice_loss.1} parent=5 // pred_check_branch
      %187 = sbr.rel (%p184) target = $region12
    $region11: #{dice_loss.1} parent=5 // pred_region
      %s188 = ssub.s32 %s11, 1
    $region12: #{dice_loss.1} parent=5 // pred_fallthru
      _
    %p189 = scmp.lt.s32.totalorder %s11, 2
    // Predicated region
    $region13: #{dice_loss.1} parent=5 // pred_check
      %p190 = pneg %p189
    $region14: #{dice_loss.1} parent=5 // pred_check_branch
      %192 = sbr.rel (%p190) target = $region16
    $region15: #{dice_loss.1} parent=5 // pred_region
      // Predicated region
      $region17: #{dice_loss.1} parent=15 // pred_check
        %p193 = pneg %p54
      $region18: #{dice_loss.1} parent=15 // pred_check_branch
        %195 = sbr.rel (%p193) target = $region20
      $region19: #{dice_loss.1} parent=15 // pred_region
        %s196 = sadd.s32 %s19, %s20
        %s197 = smul.u32 2, %s196
        %p198 = scmp.lt.s32.totalorder %s18, 1
        %s199 = scalar_select %p198, %s18, 1
        %p200 = scmp.lt.s32.totalorder %s197, 1
        %s201 = scalar_select %p200, %s197, 1
        %s202 = smul.addr %s199, 2
        %s203 = sadd.s32 %s201, %s202
        %s204 = smul.addr %s203, 4
        %s205 = scalar_lea.vmem %s0, %s204
        %s206 = sadd.s32 %s19, %s20
        %s207 = smul.u32 2, %s206
      $region20: #{dice_loss.1} parent=15 // pred_fallthru
        _
      // Predicated region
      $region21: #{dice_loss.1} parent=15 // pred_check
        %p208 = pneg %p84
      $region22: #{dice_loss.1} parent=15 // pred_check_branch
        %210 = sbr.rel (%p208) target = $region24
      $region23: #{dice_loss.1} parent=15 // pred_region
        %s211 = sadd.s32 %s19, %s20
        %s212 = smul.u32 2, %s211
        %p213 = scmp.lt.s32.totalorder %s18, 1
        %s214 = scalar_select %p213, %s18, 1
        %p215 = scmp.lt.s32.totalorder %s212, 1
        %s216 = scalar_select %p215, %s212, 1
        %s217 = smul.addr %s214, 2
        %s218 = sadd.s32 %s216, %s217
        %s219 = scalar_lea.vmem %s1, %s218
        %s220 = sadd.s32 %s19, %s20
        %s221 = smul.u32 2, %s220
      $region24: #{dice_loss.1} parent=15 // pred_fallthru
        _
    $region16: #{dice_loss.1} parent=5 // pred_fallthru
      _
    %p222 = scmp.le.s32.totalorder 1, %s11
    %p223 = scmp.lt.s32.totalorder %s11, 3
    %p224 = pnand %p222, %p223
    %p225 = pneg %p224
    // Predicated region
    $region25: #{dice_loss.1} parent=5 // pred_check
      _
    $region26: #{dice_loss.1} parent=5 // pred_check_branch
      %227 = sbr.rel (%p224) target = $region28
    $region27: #{dice_loss.1} parent=5 // pred_region
      %s228 = ssub.s32 %s11, 1
      %s229 = sadd.s32 %s22, %s23
      %s230 = smul.u32 2, %s229
      %p231 = scmp.lt.s32.totalorder %s21, 1
      %s232 = scalar_select %p231, %s21, 1
      %p233 = scmp.lt.s32.totalorder %s230, 1
      %s234 = scalar_select %p233, %s230, 1
      %s235 = smul.addr %s232, 2
      %s236 = sadd.s32 %s234, %s235
      %s237 = smul.addr %s236, 4
      %s238 = scalar_lea.vmem %s0, %s237
      %p239 = pneg %p60
      %p240 = pneg %p57
      %s241 = sadd.s32 %s22, %s23
      %s242 = smul.u32 2, %s241
      %p243 = scmp.lt.s32.totalorder %s21, 1
      %s244 = scalar_select %p243, %s21, 1
      %p245 = scmp.lt.s32.totalorder %s242, 1
      %s246 = scalar_select %p245, %s242, 1
      %s247 = smul.addr %s244, 2
      %s248 = sadd.s32 %s246, %s247
      %s249 = scalar_lea.vmem %s1, %s248
      %p250 = pneg %p90
      %p251 = pneg %p87
      %p252 = pneg %p118
      %p253 = pneg %p115
      %p254 = scmp.lt.s32.totalorder %s21, 1
      %s255 = scalar_select %p254, %s21, 1
      %p256 = scmp.lt.s32.totalorder %s22, 0
      %s257 = scalar_select %p256, %s22, 0
      %s258 = sadd.s32 %s257, %s255
      %s259 = smul.addr %s258, 4
      %s260 = scalar_lea.vmem %s2, %s259
      %p261 = pneg %p146
      %p262 = pneg %p143
      %p263 = scmp.lt.s32.totalorder %s21, 1
      %s264 = scalar_select %p263, %s21, 1
      %p265 = scmp.lt.s32.totalorder %s22, 0
      %s266 = scalar_select %p265, %s22, 0
      %s267 = sadd.s32 %s266, %s264
      %s268 = smul.addr %s267, 4
      %s269 = scalar_lea.vmem %s3, %s268
      %p270 = pneg %p174
      %p271 = pneg %p171
      %p272 = scmp.lt.s32.totalorder %s21, 1
      %s273 = scalar_select %p272, %s21, 1
      %p274 = scmp.lt.s32.totalorder %s22, 0
      %s275 = scalar_select %p274, %s22, 0
      %s276 = sadd.s32 %s275, %s273
      %s277 = smul.addr %s276, 4
      %s278 = scalar_lea.vmem %s4, %s277
      %s279 = sadd.s32 %s22, %s23
      %s280 = smul.u32 2, %s279
      %p281 = scmp.lt.s32.totalorder %s21, 1
      %s282 = scalar_select %p281, %s21, 1
      %p283 = scmp.lt.s32.totalorder %s280, 1
      %s284 = scalar_select %p283, %s280, 1
      %s285 = smul.addr %s282, 2
      %s286 = sadd.s32 %s284, %s285
      %s287 = smul.addr %s286, 4
      %s288 = scalar_lea.vmem %s0, %s287
      %s289 = sadd.s32 %s22, %s23
      %s290 = smul.u32 2, %s289
      %s291 = sadd.s32 %s22, %s23
      %s292 = smul.u32 2, %s291
      %p293 = scmp.lt.s32.totalorder %s21, 1
      %s294 = scalar_select %p293, %s21, 1
      %p295 = scmp.lt.s32.totalorder %s292, 1
      %s296 = scalar_select %p295, %s292, 1
      %s297 = smul.addr %s294, 2
      %s298 = sadd.s32 %s296, %s297
      %s299 = scalar_lea.vmem %s1, %s298
      %s300 = sadd.s32 %s22, %s23
      %s301 = smul.u32 2, %s300
      %p302 = scmp.lt.s32.totalorder %s21, 1
      %s303 = scalar_select %p302, %s21, 1
      %p304 = scmp.lt.s32.totalorder %s22, 0
      %s305 = scalar_select %p304, %s22, 0
      %s306 = sadd.s32 %s305, %s303
      %s307 = smul.addr %s306, 4
      %s308 = scalar_lea.vmem %s2, %s307
      %p309 = scmp.lt.s32.totalorder %s21, 1
      %s310 = scalar_select %p309, %s21, 1
      %p311 = scmp.lt.s32.totalorder %s22, 0
      %s312 = scalar_select %p311, %s22, 0
      %s313 = sadd.s32 %s312, %s310
      %s314 = smul.addr %s313, 4
      %s315 = scalar_lea.vmem %s3, %s314
      %p316 = scmp.lt.s32.totalorder %s21, 1
      %s317 = scalar_select %p316, %s21, 1
      %p318 = scmp.lt.s32.totalorder %s22, 0
      %s319 = scalar_select %p318, %s22, 0
      %s320 = sadd.s32 %s319, %s317
      %s321 = smul.addr %s320, 4
      %s322 = scalar_lea.vmem %s4, %s321
      %p323 = scmp.eq.s32.totalorder %s23, 0
      // Predicated region
      $region29: #{dice_loss.1} parent=27 // pred_check
        %p324 = pneg %p323
      $region30: #{dice_loss.1} parent=27 // pred_check_branch
        %326 = sbr.rel (%p324) target = $region32
      $region31: #{dice_loss.1} parent=27 // pred_region
        %vm327 = vcmask 3072
        %328 = vst.msk [vmem:[%s308] sm:$0xf] %vm327, 0.0
        %329 = vst.msk [vmem:[%s315] sm:$0xf] %vm327, 0.0
        %330 = vst.msk [vmem:[%s322] sm:$0xf] %vm327, 0.0
      $region32: #{dice_loss.1} parent=27 // pred_fallthru
        _
      %v331 = vld [vmem:[%s288] sm:$0xff]
      %v333 = vcombine.high %v331, %v331
      %vm335 = vcmask 1043456
      %v336 = vsel %vm335, %v331, -inf
      %v337 = vrot.slane %v336, 4
      %v338 = vmax.f32 %v336, %v337
      %v339 = vrot.slane %v338, 2
      %v340 = vmax.f32 %v338, %v339
      %v341 = vrot.slane %v340, 1
      %v342 = vmax.f32 %v340, %v341
      %v343 = vsel %vm335, %v333, -inf
      %v344 = vrot.slane %v343, 4
      %v345 = vmax.f32 %v343, %v344
      %v346 = vrot.slane %v345, 2
      %v347 = vmax.f32 %v345, %v346
      %v348 = vrot.slane %v347, 1
      %v349 = vmax.f32 %v347, %v348
      %v352 = vcombine.low %v342, %v349
      %v354 = vsub.f32 %v331, %v352
      %v355 = vmul.f32 %v354, 1.442695
      %v356 = vpow.pop %v355
      %v358 = vcombine.high %v356, %v356
      %v360 = vsel %vm335, %v356, 0.0
      %v361 = vrot.slane %v360, 4
      %v362 = vadd.f32 %v360, %v361
      %v363 = vrot.slane %v362, 2
      %v364 = vadd.f32 %v362, %v363
      %v365 = vrot.slane %v364, 1
      %v366 = vadd.f32 %v364, %v365
      %v367 = vsel %vm335, %v358, 0.0
      %v368 = vrot.slane %v367, 4
      %v369 = vadd.f32 %v367, %v368
      %v370 = vrot.slane %v369, 2
      %v371 = vadd.f32 %v369, %v370
      %v372 = vrot.slane %v371, 1
      %v373 = vadd.f32 %v371, %v372
      %v374 = vrcp.pop %v366
      %v375 = vrcp.pop %v373
      %v378 = vcombine.low %v374, %v375
      %v380 = vmul.f32 %v356, %v378
      %v381 = vld [vmem:[%s299] sm:$0x3]
      %v382 = vlaneseq
      %v383 = vshrl.u32 %v382, 7
      %v384 = vlaneseq
      %v385 = vshrl.u32 %v384, 7
      %v386 = vsub.s32 0, %v385
      %v387 = vrot.slane %v381, %v386
      %v388 = vlaneseq
      %v389 = vshrl.u32 %v388, 7
      %v390 = vsub.s32 1, %v389
      %v391 = vrot.slane %v381, %v390
      %vm392 = vcmp.eq.s32.totalorder %v383, %v387
      %vm393 = vcmp.eq.s32.totalorder %v383, %v391
      %v394 = vsel %vm392, 1, 0
      %v395 = vsel %vm393, 1, 0
      %v396 = vcvt.s32.f32 %v394
      %v397 = vcvt.s32.f32 %v395
      %v398 = vld [vmem:[%s308] sm:$0xf]
      %v401 = vcombine.low %v396, %v397
      %v403 = vmul.f32 %v380, %v401
      %v405 = vcombine.high %v403, %v403
      %v407 = vsel %vm335, %v403, 0.0
      %v408 = vsel %vm335, %v405, 0.0
      %v409 = vadd.f32 %v407, %v408
      %410 = vadd.xlane.f32.xlu0 %v409
      %v411 = vpop.xlane.xlu0 %410
      %v412 = vadd.f32 %v398, %v411
      %vm413 = vcmask 3072
      %414 = vst.msk [vmem:[%s308] sm:$0xf] %vm413, %v412
      %v415 = vld [vmem:[%s315] sm:$0xf]
      %v417 = vcombine.high %v380, %v380
      %v419 = vsel %vm335, %v380, 0.0
      %v420 = vsel %vm335, %v417, 0.0
      %v421 = vadd.f32 %v419, %v420
      %422 = vadd.xlane.f32.xlu0 %v421
      %v423 = vpop.xlane.xlu0 %422
      %v424 = vadd.f32 %v415, %v423
      %425 = vst.msk [vmem:[%s315] sm:$0xf] %vm413, %v424
      %v426 = vld [vmem:[%s322] sm:$0xf]
      %v427 = vsel %vm335, %v396, 0.0
      %v428 = vsel %vm335, %v397, 0.0
      %v429 = vadd.f32 %v427, %v428
      %430 = vadd.xlane.f32.xlu0 %v429
      %v431 = vpop.xlane.xlu0 %430
      %v432 = vadd.f32 %v426, %v431
      %433 = vst.msk [vmem:[%s322] sm:$0xf] %vm413, %v432
      %p434 = scmp.lt.s32.totalorder %s21, 1
      %s435 = scalar_select %p434, %s21, 1
      %p436 = scmp.lt.s32.totalorder %s22, 0
      %s437 = scalar_select %p436, %s22, 0
      %s438 = sadd.s32 %s437, %s435
      %s439 = smul.addr %s438, 4
      %s440 = scalar_lea.vmem %s2, %s439
      %p441 = scmp.lt.s32.totalorder %s21, 1
      %s442 = scalar_select %p441, %s21, 1
      %p443 = scmp.lt.s32.totalorder %s22, 0
      %s444 = scalar_select %p443, %s22, 0
      %s445 = sadd.s32 %s444, %s442
      %s446 = smul.addr %s445, 4
      %s447 = scalar_lea.vmem %s3, %s446
      %p448 = scmp.lt.s32.totalorder %s21, 1
      %s449 = scalar_select %p448, %s21, 1
      %p450 = scmp.lt.s32.totalorder %s22, 0
      %s451 = scalar_select %p450, %s22, 0
      %s452 = sadd.s32 %s451, %s449
      %s453 = smul.addr %s452, 4
      %s454 = scalar_lea.vmem %s4, %s453
      // Predicated region
      $region33: #{dice_loss.1} parent=27 // pred_check
        %p455 = pneg %p115
      $region34: #{dice_loss.1} parent=27 // pred_check_branch
        %457 = sbr.rel (%p455) target = $region36
      $region35: #{dice_loss.1} parent=27 // pred_region
        _
      $region36: #{dice_loss.1} parent=27 // pred_fallthru
        _
      // Predicated region
      $region37: #{dice_loss.1} parent=27 // pred_check
        %p458 = pneg %p143
      $region38: #{dice_loss.1} parent=27 // pred_check_branch
        %460 = sbr.rel (%p458) target = $region40
      $region39: #{dice_loss.1} parent=27 // pred_region
        _
      $region40: #{dice_loss.1} parent=27 // pred_fallthru
        _
      // Predicated region
      $region41: #{dice_loss.1} parent=27 // pred_check
        %p461 = pneg %p171
      $region42: #{dice_loss.1} parent=27 // pred_check_branch
        %463 = sbr.rel (%p461) target = $region44
      $region43: #{dice_loss.1} parent=27 // pred_region
        _
      $region44: #{dice_loss.1} parent=27 // pred_fallthru
        _
    $region28: #{dice_loss.1} parent=5 // pred_fallthru
      _
    %p464 = scmp.le.s32.totalorder 2, %s11
    // Predicated region
    $region45: #{dice_loss.1} parent=5 // pred_check
      %p465 = pneg %p464
    $region46: #{dice_loss.1} parent=5 // pred_check_branch
      %467 = sbr.rel (%p465) target = $region48
    $region47: #{dice_loss.1} parent=5 // pred_region
      %s468 = ssub.s32 %s11, 2
      // Predicated region
      $region49: #{dice_loss.1} parent=47 // pred_check
        %p469 = pneg %p121
      $region50: #{dice_loss.1} parent=47 // pred_check_branch
        %471 = sbr.rel (%p469) target = $region52
      $region51: #{dice_loss.1} parent=47 // pred_region
        %p472 = scmp.lt.s32.totalorder %s24, 1
        %s473 = scalar_select %p472, %s24, 1
        %p474 = scmp.lt.s32.totalorder %s25, 0
        %s475 = scalar_select %p474, %s25, 0
        %s476 = sadd.s32 %s475, %s473
        %s477 = smul.addr %s476, 4
        %s478 = scalar_lea.vmem %s2, %s477
      $region52: #{dice_loss.1} parent=47 // pred_fallthru
        _
      // Predicated region
      $region53: #{dice_loss.1} parent=47 // pred_check
        %p479 = pneg %p149
      $region54: #{dice_loss.1} parent=47 // pred_check_branch
        %481 = sbr.rel (%p479) target = $region56
      $region55: #{dice_loss.1} parent=47 // pred_region
        %p482 = scmp.lt.s32.totalorder %s24, 1
        %s483 = scalar_select %p482, %s24, 1
        %p484 = scmp.lt.s32.totalorder %s25, 0
        %s485 = scalar_select %p484, %s25, 0
        %s486 = sadd.s32 %s485, %s483
        %s487 = smul.addr %s486, 4
        %s488 = scalar_lea.vmem %s3, %s487
      $region56: #{dice_loss.1} parent=47 // pred_fallthru
        _
      // Predicated region
      $region57: #{dice_loss.1} parent=47 // pred_check
        %p489 = pneg %p177
      $region58: #{dice_loss.1} parent=47 // pred_check_branch
        %491 = sbr.rel (%p489) target = $region60
      $region59: #{dice_loss.1} parent=47 // pred_region
        %p492 = scmp.lt.s32.totalorder %s24, 1
        %s493 = scalar_select %p492, %s24, 1
        %p494 = scmp.lt.s32.totalorder %s25, 0
        %s495 = scalar_select %p494, %s25, 0
        %s496 = sadd.s32 %s495, %s493
        %s497 = smul.addr %s496, 4
        %s498 = scalar_lea.vmem %s4, %s497
      $region60: #{dice_loss.1} parent=47 // pred_fallthru
        _
    $region48: #{dice_loss.1} parent=5 // pred_fallthru
      _
  $region6: #{dice_loss.1} parent=0 // loop_footer
    %s15 = sadd.s32 1, %s11
  $region7: #{dice_loss.1} parent=0 // loop_footer_branch
    %10 = sbr.rel target = $region3
  $region8: #{dice_loss.1} parent=0 // loop_exit
    _

</llo_original>
